<compile_context>
chip_gen: v6e
topology: v6e:2x2x1
jax: 0.10.0
libtpu: 0.0.40
codegen_flags: <defaults>
</compile_context>

<pallas_src>
import math

import jax
import jax.numpy as jnp
from jax import lax
from jax.experimental import pallas as pl
from jax.experimental.pallas import tpu as pltpu

_NEG_BIG = -1e30


def _round_up(x, k):
    return ((x + k - 1) // k) * k


def _adaface_kernel(m, h, s, batch, tb, tc):
    # Fused margin constants:
    #   target:     (cos - (m + h*(1-cos))) * s = cos * s*(1+h) - s*(m+h)
    #   non-target:  cos * s
    s_plain = float(s)
    s_tgt_scale = float(s) * (1.0 + float(h))
    s_tgt_bias = float(s) * (float(m) + float(h))

    def kernel(emb_ref, w_ref, wmeta_ref, labels_ref, out_ref,
               emb_n_ref, m_ref, l_ref, t_ref):
        bi = pl.program_id(0)
        ci = pl.program_id(1)
        nc = pl.num_programs(1)

        # ---- once per batch tile: normalize embeddings, reset accumulators --
        @pl.when(ci == 0)
        def _init():
            e = emb_ref[...]                                      # (tb, E) f32
            ssq = jnp.sum(e * e, axis=1, keepdims=True)
            emb_n_ref[...] = (e * lax.rsqrt(jnp.maximum(ssq, 1e-24))
                              ).astype(jnp.bfloat16)
            m_ref[...] = jnp.full((tb, 1), _NEG_BIG, jnp.float32)
            l_ref[...] = jnp.zeros((tb, 1), jnp.float32)
            t_ref[...] = jnp.zeros((tb, 1), jnp.float32)

        # ---- MXU: bf16 x bf16 -> f32, contracting over E ----
        raw = lax.dot_general(
            emb_n_ref[...], w_ref[...],
            dimension_numbers=(((1,), (1,)), ((), ())),
            preferred_element_type=jnp.float32)                   # (tb, tc)

        rnorm = wmeta_ref[0:1, :]                                 # (1, tc) f32
        pad_bias = wmeta_ref[1:2, :]                              # (1, tc) 0 / -1e30

        # Cosine logits: per-class inverse-norm rescale, clamp (as in PyTorch).
        cos = jnp.clip(raw * rnorm, -1.0 + 1e-7, 1.0 - 1e-7)

        # One-hot for this class tile (labels shifted into tile coordinates).
        labels_adj = labels_ref[...] - ci * tc                    # (tb, 1) i32
        onehot = lax.broadcasted_iota(jnp.int32, (tb, tc), 1) == labels_adj

        # Fused margin + scale, then additive mask for padded class columns.
        z = jnp.where(onehot, cos * s_tgt_scale - s_tgt_bias, cos * s_plain)
        z = z + pad_bias

        # ---- online softmax accumulation over class tiles ----
        m_prev = m_ref[...]
        m_new = jnp.maximum(m_prev, jnp.max(z, axis=1, keepdims=True))
        alpha = jnp.exp(m_prev - m_new)
        p = jnp.exp(z - m_new)
        l_ref[...] = alpha * l_ref[...] + jnp.sum(p, axis=1, keepdims=True)
        t_ref[...] = t_ref[...] + jnp.sum(jnp.where(onehot, z, 0.0),
                                          axis=1, keepdims=True)
        m_ref[...] = m_new

        # ---- finalize: per-example loss for this batch tile ----
        @pl.when(ci == nc - 1)
        def _finalize():
            lse = m_ref[...] + jnp.log(l_ref[...])
            per_example = lse - t_ref[...]                        # (tb, 1)
            row = bi * tb + lax.broadcasted_iota(jnp.int32, (tb, 1), 0)
            out_ref[...] = jnp.where(row < batch, per_example, 0.0)

    return kernel


def adaface_loss(embeddings, weight, labels, m=0.4, h=0.333, s=64.0,
                 tb=128, tc=512):
    """embeddings: (B,E) f32; weight: (C,E) f32; labels: (B,) int -> scalar f32."""
    B, E = embeddings.shape
    C, E2 = weight.shape
    assert E == E2

    tb = _round_up(min(tb, _round_up(B, 8)), 8)
    tc = _round_up(min(tc, _round_up(C, 128)), 128)
    B_pad = _round_up(B, tb)
    C_pad = _round_up(C, tc)
    nb = B_pad // tb
    nc = C_pad // tc

    emb = embeddings.astype(jnp.float32)
    w = weight.astype(jnp.float32)

    # Hoisted weight preprocessing (done once, not per batch tile):
    #   * per-class inverse L2 norm (f32)  -> kernel rescales logits per column,
    #   * additive padding bias (0 / -1e30) -> kernel masks pad cols with 1 add,
    #   * bf16 cast of the raw weight (halves streamed HBM bytes, native MXU).
    w_rnorm = lax.rsqrt(jnp.maximum(jnp.sum(w * w, axis=1), 1e-24))
    w_rnorm = jnp.pad(w_rnorm, (0, C_pad - C))
    pad_bias = jnp.where(jnp.arange(C_pad) < C, 0.0, _NEG_BIG).astype(jnp.float32)
    wmeta = jnp.stack([w_rnorm, pad_bias], axis=0)                # (2, C_pad)

    w_bf16 = jnp.pad(w, ((0, C_pad - C), (0, 0))).astype(jnp.bfloat16)
    emb_p = jnp.pad(emb, ((0, B_pad - B), (0, 0)))
    labels_p = jnp.pad(labels.astype(jnp.int32), (0, B_pad - B)).reshape(B_pad, 1)

    cost = pl.CostEstimate(
        flops=int(2 * B_pad * C_pad * E + 10 * B_pad * C_pad),
        transcendentals=int(B_pad * C_pad + 4 * B_pad),
        bytes_accessed=int(4 * B_pad * E + 2 * C_pad * E * nb
                           + 8 * C_pad * nb + 8 * B_pad),
    )

    per_example = pl.pallas_call(
        _adaface_kernel(m, h, s, B, tb, tc),
        out_shape=jax.ShapeDtypeStruct((B_pad, 1), jnp.float32),
        grid_spec=pltpu.PrefetchScalarGridSpec(
            num_scalar_prefetch=0,
            grid=(nb, nc),
            in_specs=[
                pl.BlockSpec((tb, E), lambda bi, ci: (bi, 0)),    # embeddings f32
                pl.BlockSpec((tc, E), lambda bi, ci: (ci, 0)),    # weight (bf16)
                pl.BlockSpec((2, tc), lambda bi, ci: (0, ci)),    # rnorm + pad bias
                pl.BlockSpec((tb, 1), lambda bi, ci: (bi, 0)),    # labels
            ],
            out_specs=pl.BlockSpec((tb, 1), lambda bi, ci: (bi, 0)),
            scratch_shapes=[
                pltpu.VMEM((tb, E), jnp.bfloat16),   # normalized emb (cached)
                pltpu.VMEM((tb, 1), jnp.float32),    # running row max
                pltpu.VMEM((tb, 1), jnp.float32),    # running sum of exp
                pltpu.VMEM((tb, 1), jnp.float32),    # target logit
            ],
        ),
        compiler_params=pltpu.CompilerParams(
            dimension_semantics=("parallel", "arbitrary")),
        cost_estimate=cost,
    )(emb_p, w_bf16, wmeta, labels_p)

    return jnp.sum(per_example) / jnp.float32(B)


def _reference_loss_f32(embeddings, weight, labels, m=0.4, h=0.333, s=64.0):
    """Pure-JAX f32 reference mirroring the PyTorch forward exactly."""
    emb_n = embeddings / jnp.maximum(
        jnp.linalg.norm(embeddings, axis=1, keepdims=True), 1e-12)
    w_n = weight / jnp.maximum(
        jnp.linalg.norm(weight, axis=1, keepdims=True), 1e-12)
    logits = jnp.clip(emb_n @ w_n.T, -1.0 + 1e-7, 1.0 - 1e-7)
    margin = m + h * (1.0 - logits)
    B = logits.shape[0]
    rows = jnp.arange(B)
    tgt = logits[rows, labels] - margin[rows, labels]
    logits = logits.at[rows, labels].set(tgt) * s
    lse = jax.nn.logsumexp(logits, axis=1)
    return jnp.mean(lse - logits[rows, labels])


def _reference_loss_bf16(embeddings, weight, labels, m=0.4, h=0.333, s=64.0):
    """Reference mirroring the kernel's bf16-MXU / f32-accumulate numerics."""
    ssq = jnp.sum(embeddings * embeddings, axis=1, keepdims=True)
    emb_n = (embeddings * lax.rsqrt(jnp.maximum(ssq, 1e-24))).astype(jnp.bfloat16)
    w_rn = lax.rsqrt(jnp.maximum(jnp.sum(weight * weight, axis=1), 1e-24))
    raw = lax.dot_general(emb_n, weight.astype(jnp.bfloat16),
                          dimension_numbers=(((1,), (1,)), ((), ())),
                          preferred_element_type=jnp.float32)
    logits = jnp.clip(raw * w_rn[None, :], -1.0 + 1e-7, 1.0 - 1e-7)
    margin = m + h * (1.0 - logits)
    B = logits.shape[0]
    rows = jnp.arange(B)
    tgt = logits[rows, labels] - margin[rows, labels]
    logits = logits.at[rows, labels].set(tgt) * s
    lse = jax.nn.logsumexp(logits, axis=1)
    return jnp.mean(lse - logits[rows, labels])


if __name__ == "__main__":
    # Small, module-consistent shapes: batch=13, embedding_size=128,
    # class_num=300 — deliberately NOT tile-aligned so the row/class padding
    # masks and the multi-tile (2 x 3) grid (parallel B, streamed C) are hit.
    B, E, C = 13, 128, 300
    key = jax.random.PRNGKey(0)
    k_emb, k_w, k_lab = jax.random.split(key, 3)

    embeddings = jax.random.normal(k_emb, (B, E), dtype=jnp.float32)

    # Deterministic xavier_uniform_-style init: bound = sqrt(6/(fan_in+fan_out)).
    bound = math.sqrt(6.0 / (E + C))
    weight = jax.random.uniform(k_w, (C, E), dtype=jnp.float32,
                                minval=-bound, maxval=bound)
    labels = jax.random.randint(k_lab, (B,), 0, C, dtype=jnp.int32)

    loss = adaface_loss(embeddings, weight, labels, tb=8, tc=128)
    loss = jax.block_until_ready(loss)

    # Tight check against the reference that mirrors the kernel's bf16 path.
    ref_bf16 = _reference_loss_bf16(embeddings, weight, labels)
    assert jnp.allclose(loss, ref_bf16, rtol=5e-4, atol=5e-4), (loss, ref_bf16)

    # Loose check against the full-f32 PyTorch-equivalent reference
    # (difference is only the bf16 cast of the MXU matmul inputs).
    ref_f32 = _reference_loss_f32(embeddings, weight, labels)
    assert jnp.allclose(loss, ref_f32, rtol=2e-2, atol=2e-2), (loss, ref_f32)

    print("KERNEL_OK")
</pallas_src>

<mosaic_0001>
module attributes {stable_mosaic.version = 11 : i64} {
  func.func @kernel(%arg0: i32, %arg1: i32, %arg2: memref<8x128xf32, #tpu.memory_space<vmem>>, %arg3: memref<128x128xbf16, #tpu.memory_space<vmem>>, %arg4: memref<2x128xf32, #tpu.memory_space<vmem>>, %arg5: memref<8x1xi32, #tpu.memory_space<vmem>>, %arg6: memref<8x1xf32, #tpu.memory_space<vmem>>, %arg7: memref<8x128xbf16, #tpu.memory_space<vmem>>, %arg8: memref<8x1xf32, #tpu.memory_space<vmem>>, %arg9: memref<8x1xf32, #tpu.memory_space<vmem>>, %arg10: memref<8x1xf32, #tpu.memory_space<vmem>>) attributes {dimension_semantics = [#tpu.dimension_semantics<parallel>, #tpu.dimension_semantics<arbitrary>], iteration_bounds = array<i64: 2, 3>, scalar_prefetch = 0 : i64, scratch_operands = 4 : i64, tpu.core_type = #tpu.core_type<tc>, window_params = [{transform_indices = @transform_0, window_bounds = array<i64: 8, 128>}, {transform_indices = @transform_1, window_bounds = array<i64: 128, 128>}, {transform_indices = @transform_2, window_bounds = array<i64: 2, 128>}, {transform_indices = @transform_3, window_bounds = array<i64: 8, 1>}, {transform_indices = @transform_4, window_bounds = array<i64: 8, 1>}]} {
    %c0_i32 = arith.constant 0 : i32
    %0 = arith.cmpi eq, %arg1, %c0_i32 : i32
    %1 = arith.extui %0 : i1 to i32
    %c0_i32_0 = arith.constant 0 : i32
    %2 = arith.cmpi ne, %1, %c0_i32_0 : i32
    scf.if %2 {
      %c0_31 = arith.constant 0 : index
      %c0_32 = arith.constant 0 : index
      %56 = vector.load %arg2[%c0_31, %c0_32] : memref<8x128xf32, #tpu.memory_space<vmem>>, vector<8x128xf32>
      %57 = arith.mulf %56, %56 : vector<8x128xf32>
      %cst_33 = arith.constant dense<0.000000e+00> : vector<8xf32>
      %58 = vector.multi_reduction <add>, %57, %cst_33 [1] : vector<8x128xf32> to vector<8xf32>
      %59 = vector.shape_cast %58 : vector<8xf32> to vector<8x1xf32>
      %cst_34 = arith.constant 1.000000e-24 : f32
      %60 = vector.broadcast %cst_34 : f32 to vector<8x1xf32>
      %61 = arith.maximumf %59, %60 : vector<8x1xf32>
      %62 = math.rsqrt %61 : vector<8x1xf32>
      %63 = vector.broadcast %62 : vector<8x1xf32> to vector<8x128xf32>
      %64 = arith.mulf %56, %63 : vector<8x128xf32>
      %65 = arith.truncf %64 : vector<8x128xf32> to vector<8x128xbf16>
      %c0_35 = arith.constant 0 : index
      %c0_36 = arith.constant 0 : index
      %66 = vector.load %arg7[%c0_35, %c0_36] : memref<8x128xbf16, #tpu.memory_space<vmem>>, vector<8x128xbf16>
      tpu.vector_store %arg7[%c0_35, %c0_36], %65 {strides = array<i32>} : memref<8x128xbf16, #tpu.memory_space<vmem>>, vector<8x128xbf16>,
      %cst_37 = arith.constant -1.000000e+30 : f32
      %67 = vector.broadcast %cst_37 : f32 to vector<8x1xf32>
      %c0_38 = arith.constant 0 : index
      %c0_39 = arith.constant 0 : index
      %68 = vector.load %arg8[%c0_38, %c0_39] : memref<8x1xf32, #tpu.memory_space<vmem>>, vector<8x1xf32>
      tpu.vector_store %arg8[%c0_38, %c0_39], %67 {strides = array<i32>} : memref<8x1xf32, #tpu.memory_space<vmem>>, vector<8x1xf32>,
      %cst_40 = arith.constant 0.000000e+00 : f32
      %69 = vector.broadcast %cst_40 : f32 to vector<8x1xf32>
      %c0_41 = arith.constant 0 : index
      %c0_42 = arith.constant 0 : index
      %70 = vector.load %arg9[%c0_41, %c0_42] : memref<8x1xf32, #tpu.memory_space<vmem>>, vector<8x1xf32>
      tpu.vector_store %arg9[%c0_41, %c0_42], %69 {strides = array<i32>} : memref<8x1xf32, #tpu.memory_space<vmem>>, vector<8x1xf32>,
      %cst_43 = arith.constant 0.000000e+00 : f32
      %71 = vector.broadcast %cst_43 : f32 to vector<8x1xf32>
      %c0_44 = arith.constant 0 : index
      %c0_45 = arith.constant 0 : index
      %72 = vector.load %arg10[%c0_44, %c0_45] : memref<8x1xf32, #tpu.memory_space<vmem>>, vector<8x1xf32>
      tpu.vector_store %arg10[%c0_44, %c0_45], %71 {strides = array<i32>} : memref<8x1xf32, #tpu.memory_space<vmem>>, vector<8x1xf32>,
    } else {
    }
    %c0 = arith.constant 0 : index
    %c0_1 = arith.constant 0 : index
    %3 = vector.load %arg7[%c0, %c0_1] : memref<8x128xbf16, #tpu.memory_space<vmem>>, vector<8x128xbf16>
    %c0_2 = arith.constant 0 : index
    %c0_3 = arith.constant 0 : index
    %4 = vector.load %arg3[%c0_2, %c0_3] : memref<128x128xbf16, #tpu.memory_space<vmem>>, vector<128x128xbf16>
    %cst = arith.constant dense<0.000000e+00> : vector<8x128xf32>
    %5 = tpu.matmul %3, %4, %cst {dimension_numbers = #tpu.dot_dimension_numbers<[1], [1], [0], [0], [0, 0, 1, 0], [], []>} : vector<8x128xbf16>, vector<128x128xbf16>, vector<8x128xf32> -> vector<8x128xf32>
    %c0_4 = arith.constant 0 : index
    %c0_5 = arith.constant 0 : index
    %6 = vector.load %arg4[%c0_4, %c0_5] : memref<2x128xf32, #tpu.memory_space<vmem>>, vector<1x128xf32>
    %c1 = arith.constant 1 : index
    %c0_6 = arith.constant 0 : index
    %7 = vector.load %arg4[%c1, %c0_6] : memref<2x128xf32, #tpu.memory_space<vmem>>, vector<1x128xf32>
    %8 = vector.broadcast %6 : vector<1x128xf32> to vector<8x128xf32>
    %9 = arith.mulf %5, %8 : vector<8x128xf32>
    %cst_7 = arith.constant -0.99999988 : f32
    %cst_8 = arith.constant 0.99999988 : f32
    %10 = vector.broadcast %cst_7 : f32 to vector<8x128xf32>
    %11 = arith.maximumf %10, %9 : vector<8x128xf32>
    %12 = vector.broadcast %cst_8 : f32 to vector<8x128xf32>
    %13 = arith.minimumf %12, %11 : vector<8x128xf32>
    %c0_9 = arith.constant 0 : index
    %c0_10 = arith.constant 0 : index
    %14 = vector.load %arg5[%c0_9, %c0_10] : memref<8x1xi32, #tpu.memory_space<vmem>>, vector<8x1xi32>
    %c128_i32 = arith.constant 128 : i32
    %15 = arith.muli %arg1, %c128_i32 : i32
    %16 = vector.broadcast %15 : i32 to vector<8x1xi32>
    %17 = arith.subi %14, %16 : vector<8x1xi32>
    %18 = tpu.iota {dimensions = array<i32: 1>} : vector<8x128xi32>
    %19 = vector.broadcast %17 : vector<8x1xi32> to vector<8x128xi32>
    %20 = arith.cmpi eq, %18, %19 : vector<8x128xi32>
    %cst_11 = arith.constant 85.3119964 : f32
    %21 = vector.broadcast %cst_11 : f32 to vector<8x128xf32>
    %22 = arith.mulf %13, %21 : vector<8x128xf32>
    %cst_12 = arith.constant 4.691200e+01 : f32
    %23 = vector.broadcast %cst_12 : f32 to vector<8x128xf32>
    %24 = arith.subf %22, %23 : vector<8x128xf32>
    %cst_13 = arith.constant 6.400000e+01 : f32
    %25 = vector.broadcast %cst_13 : f32 to vector<8x128xf32>
    %26 = arith.mulf %13, %25 : vector<8x128xf32>
    %27 = arith.select %20, %24, %26 : vector<8x128xi1>, vector<8x128xf32>
    %28 = vector.broadcast %7 : vector<1x128xf32> to vector<8x128xf32>
    %29 = arith.addf %27, %28 : vector<8x128xf32>
    %c0_14 = arith.constant 0 : index
    %c0_15 = arith.constant 0 : index
    %30 = vector.load %arg8[%c0_14, %c0_15] : memref<8x1xf32, #tpu.memory_space<vmem>>, vector<8x1xf32>
    %cst_16 = arith.constant dense<0xFF800000> : vector<8xf32>
    %31 = vector.multi_reduction <maximumf>, %29, %cst_16 [1] : vector<8x128xf32> to vector<8xf32>
    %32 = vector.shape_cast %31 : vector<8xf32> to vector<8x1xf32>
    %33 = arith.maximumf %30, %32 : vector<8x1xf32>
    %34 = arith.subf %30, %33 : vector<8x1xf32>
    %35 = math.exp %34 : vector<8x1xf32>
    %36 = vector.broadcast %33 : vector<8x1xf32> to vector<8x128xf32>
    %37 = arith.subf %29, %36 : vector<8x128xf32>
    %38 = math.exp %37 : vector<8x128xf32>
    %c0_17 = arith.constant 0 : index
    %c0_18 = arith.constant 0 : index
    %39 = vector.load %arg9[%c0_17, %c0_18] : memref<8x1xf32, #tpu.memory_space<vmem>>, vector<8x1xf32>
    %40 = arith.mulf %35, %39 : vector<8x1xf32>
    %cst_19 = arith.constant dense<0.000000e+00> : vector<8xf32>
    %41 = vector.multi_reduction <add>, %38, %cst_19 [1] : vector<8x128xf32> to vector<8xf32>
    %42 = vector.shape_cast %41 : vector<8xf32> to vector<8x1xf32>
    %43 = arith.addf %40, %42 : vector<8x1xf32>
    %c0_20 = arith.constant 0 : index
    %c0_21 = arith.constant 0 : index
    %44 = vector.load %arg9[%c0_20, %c0_21] : memref<8x1xf32, #tpu.memory_space<vmem>>, vector<8x1xf32>
    tpu.vector_store %arg9[%c0_20, %c0_21], %43 {strides = array<i32>} : memref<8x1xf32, #tpu.memory_space<vmem>>, vector<8x1xf32>,
    %c0_22 = arith.constant 0 : index
    %c0_23 = arith.constant 0 : index
    %45 = vector.load %arg10[%c0_22, %c0_23] : memref<8x1xf32, #tpu.memory_space<vmem>>, vector<8x1xf32>
    %cst_24 = arith.constant 0.000000e+00 : f32
    %46 = vector.broadcast %cst_24 : f32 to vector<8x128xf32>
    %47 = arith.select %20, %29, %46 : vector<8x128xi1>, vector<8x128xf32>
    %cst_25 = arith.constant dense<0.000000e+00> : vector<8xf32>
    %48 = vector.multi_reduction <add>, %47, %cst_25 [1] : vector<8x128xf32> to vector<8xf32>
    %49 = vector.shape_cast %48 : vector<8xf32> to vector<8x1xf32>
    %50 = arith.addf %45, %49 : vector<8x1xf32>
    %c0_26 = arith.constant 0 : index
    %c0_27 = arith.constant 0 : index
    %51 = vector.load %arg10[%c0_26, %c0_27] : memref<8x1xf32, #tpu.memory_space<vmem>>, vector<8x1xf32>
    tpu.vector_store %arg10[%c0_26, %c0_27], %50 {strides = array<i32>} : memref<8x1xf32, #tpu.memory_space<vmem>>, vector<8x1xf32>,
    %c0_28 = arith.constant 0 : index
    %c0_29 = arith.constant 0 : index
    %52 = vector.load %arg8[%c0_28, %c0_29] : memref<8x1xf32, #tpu.memory_space<vmem>>, vector<8x1xf32>
    tpu.vector_store %arg8[%c0_28, %c0_29], %33 {strides = array<i32>} : memref<8x1xf32, #tpu.memory_space<vmem>>, vector<8x1xf32>,
    %c2_i32 = arith.constant 2 : i32
    %53 = arith.cmpi eq, %arg1, %c2_i32 : i32
    %54 = arith.extui %53 : i1 to i32
    %c0_i32_30 = arith.constant 0 : i32
    %55 = arith.cmpi ne, %54, %c0_i32_30 : i32
    scf.if %55 {
      %c0_31 = arith.constant 0 : index
      %c0_32 = arith.constant 0 : index
      %56 = vector.load %arg8[%c0_31, %c0_32] : memref<8x1xf32, #tpu.memory_space<vmem>>, vector<8x1xf32>
      %c0_33 = arith.constant 0 : index
      %c0_34 = arith.constant 0 : index
      %57 = vector.load %arg9[%c0_33, %c0_34] : memref<8x1xf32, #tpu.memory_space<vmem>>, vector<8x1xf32>
      %58 = math.log %57 : vector<8x1xf32>
      %59 = arith.addf %56, %58 : vector<8x1xf32>
      %c0_35 = arith.constant 0 : index
      %c0_36 = arith.constant 0 : index
      %60 = vector.load %arg10[%c0_35, %c0_36] : memref<8x1xf32, #tpu.memory_space<vmem>>, vector<8x1xf32>
      %61 = arith.subf %59, %60 : vector<8x1xf32>
      %c8_i32 = arith.constant 8 : i32
      %62 = arith.muli %arg0, %c8_i32 : i32
      %63 = tpu.iota {dimensions = array<i32: 0>} : vector<8x1xi32>
      %64 = vector.broadcast %62 : i32 to vector<8x1xi32>
      %65 = arith.addi %64, %63 : vector<8x1xi32>
      %c13_i32 = arith.constant 13 : i32
      %66 = vector.broadcast %c13_i32 : i32 to vector<8x1xi32>
      %67 = arith.cmpi slt, %65, %66 : vector<8x1xi32>
      %cst_37 = arith.constant 0.000000e+00 : f32
      %68 = vector.broadcast %cst_37 : f32 to vector<8x1xf32>
      %69 = arith.select %67, %61, %68 : vector<8x1xi1>, vector<8x1xf32>
      %c0_38 = arith.constant 0 : index
      %c0_39 = arith.constant 0 : index
      %70 = vector.load %arg6[%c0_38, %c0_39] : memref<8x1xf32, #tpu.memory_space<vmem>>, vector<8x1xf32>
      tpu.vector_store %arg6[%c0_38, %c0_39], %69 {strides = array<i32>} : memref<8x1xf32, #tpu.memory_space<vmem>>, vector<8x1xf32>,
    } else {
    }
    return
  }
  func.func @transform_0(%arg0: i32, %arg1: i32) -> (i32, i32) {
    %c0_i32 = arith.constant 0 : i32
    %c0_i32_0 = arith.constant 0 : i32
    return %arg0, %c0_i32 : i32, i32
  }
  func.func @transform_1(%arg0: i32, %arg1: i32) -> (i32, i32) {
    %c0_i32 = arith.constant 0 : i32
    %c0_i32_0 = arith.constant 0 : i32
    return %arg1, %c0_i32 : i32, i32
  }
  func.func @transform_2(%arg0: i32, %arg1: i32) -> (i32, i32) {
    %c0_i32 = arith.constant 0 : i32
    %c0_i32_0 = arith.constant 0 : i32
    return %c0_i32, %arg1 : i32, i32
  }
  func.func @transform_3(%arg0: i32, %arg1: i32) -> (i32, i32) {
    %c0_i32 = arith.constant 0 : i32
    %c0_i32_0 = arith.constant 0 : i32
    return %arg0, %c0_i32 : i32, i32
  }
  func.func @transform_4(%arg0: i32, %arg1: i32) -> (i32, i32) {
    %c0_i32 = arith.constant 0 : i32
    %c0_i32_0 = arith.constant 0 : i32
    return %arg0, %c0_i32 : i32, i32
  }
}

</mosaic_0001>

<llo_original>
// kernel: tpu_custom_call.1
$region0: #{tpu_custom_call.1}
  #allocation0 [shape = 'u32[]', space=smem, size = 0x4, offset = 0x4, fixed_abs, tag = 'smem constant byte address 0x4 - core index']
  #allocation1 [shape = 'u32[144,128]{1,0:T(1,128)}', space=vmem, size = 0x12000, scoped, tag = 'internal scratch']
  #allocation2 [shape = 'bf16[8,128]{1,0:T(8,128)(2,1)}', space=vmem, size = 0x800, scoped, tag = 'scratch operand']
  #allocation3 [shape = 'f32[8,1]{1,0:T(8,128)}', space=vmem, size = 0x1000, scoped, tag = 'scratch operand']
  #allocation4 [shape = 'f32[8,1]{1,0:T(8,128)}', space=vmem, size = 0x1000, scoped, tag = 'scratch operand']
  #allocation5 [shape = 'f32[8,1]{1,0:T(8,128)}', space=vmem, size = 0x1000, scoped, tag = 'scratch operand']
  %s0 = inlined_call_operand.vmem [shape: f32[16,128], index: 0, kind: input, shape index: {}]
  %s1 = inlined_call_operand.hbm [shape: bf16[384,128], index: 1, kind: input, shape index: {}]
  %s2 = inlined_call_operand.hbm [shape: f32[2,384], index: 2, kind: input, shape index: {}]
  %s3 = inlined_call_operand.vmem [shape: s32[16,1], index: 3, kind: input, shape index: {}]
  %s4 = inlined_call_operand.vmem [shape: f32[16,1], index: 4, kind: output, shape index: {}]
  %s5 = sld [smem:[#allocation0]]
  $region65: #{tpu_custom_call.1} parent=0
    _
  %s7 = ssub.s32 1, %s5
  %s8 = scalar_select 0, %s7, %s5
  $region1: #{tpu_custom_call.1} parent=0
    #allocation6 [shape = 'u8[65536]{0}', space=vmem, size = 0x10000, scoped, tag = 'input window, operand 1']
    #allocation7 [shape = 's32[2]{0}', space=sflag, size = 0x8, scoped, tag = 'scoped memory for tpu_custom_call.1']
    #allocation8 [shape = 'u8[2048]{0}', space=vmem, size = 0x800, scoped, tag = 'input window, operand 2']
    #allocation9 [shape = 's32[2]{0}', space=sflag, size = 0x8, scoped, tag = 'scoped memory for tpu_custom_call.1']
    %9 = vsyncpa [#allocation7], 0
    %s10 = scalar_lea.sflag [#allocation7], 1
    %11 = vsyncpa %s10, 0
    %12 = vsyncpa [#allocation9], 0
    %s13 = scalar_lea.sflag [#allocation9], 1
    %14 = vsyncpa %s13, 0
    loop: start=0, step=1, limit=8
    $region2: #{tpu_custom_call.1} parent=1 // loop_pre_header
      _
    $region3: #{tpu_custom_call.1} parent=1 // loop_header
      %s16 = sphi 0, %s20
      %p17 = scmp.ge.s32.totalorder %s16, 8
      %s23 = sphi 0, %s35
      %s24 = sphi 0, %s31
      %s25 = sphi 0, %s23
      %s26 = sphi 0, %s24
      %s27 = sphi 0, %s25
      %s28 = sphi 0, %s26
      %s38 = sphi 0, %s40
      %s41 = sphi 0, %s38
      %s42 = sphi 0, %s41
      %s58 = sphi 0, %s42
      %s64 = sphi 0, %s66
      %s67 = sphi 0, %s64
      %s68 = sphi 0, %s67
      %s84 = sphi 0, %s68
      %s90 = sphi 0, %s92
      %s93 = sphi 0, %s90
      %s94 = sphi 0, %s93
      %s110 = sphi 0, %s94
      %s116 = sphi 0, %s118
      %s119 = sphi 0, %s116
      %s120 = sphi 0, %s119
      %s136 = sphi 0, %s120
      %s142 = sphi 0, %s144
      %s145 = sphi 0, %s142
      %s146 = sphi 0, %s145
      %s162 = sphi 0, %s146
    $region4: #{tpu_custom_call.1} parent=1 // loop_header_branch
      %19 = sbr.rel (%p17) target = $region8
    $region5: #{tpu_custom_call.1} parent=1 // loop_body
      %s21 = ssub.s32 %s16, 1
      %s22 = ssub.s32 %s16, 2
      %s29 = sadd.s32 1, %s24
      %p30 = scmp.ge.s32.totalorder %s29, 3
      %s31 = scalar_select %p30, 0, %s29
      %s32 = sadd.s32 1, %s23
      %s33 = scalar_select %p30, %s32, %s23
      %p34 = scmp.ge.s32.totalorder %s33, 2
      %s35 = scalar_select %p34, 0, %s33
      %s36 = ssub.s32 %s23, %s35
      %p37 = scmp.eq.s32.totalorder %s36, 0
      %s39 = sadd.s32 %s38, 1
      %s40 = scalar_select %p37, %s38, %s39
      %p43 = pneg %p37
      %p44 = scmp.eq.s32.totalorder %s16, 5
      %p45 = por %p43, %p44
      %p46 = scmp.ne.s32.totalorder %s38, %s41
      %p47 = scmp.eq.s32.totalorder %s16, 0
      %p48 = por %p46, %p47
      %p49 = scmp.ne.s32.totalorder %s38, %s41
      %p50 = scmp.eq.s32.totalorder %s21, 5
      %p51 = por %p49, %p50
      %p52 = scmp.ne.s32.totalorder %s41, %s42
      %p53 = scmp.eq.s32.totalorder %s21, 0
      %p54 = por %p52, %p53
      %p55 = scmp.ne.s32.totalorder %s41, %s42
      %p56 = scmp.eq.s32.totalorder %s22, 5
      %p57 = por %p55, %p56
      %p59 = scmp.ne.s32.totalorder %s42, %s58
      %p60 = scmp.eq.s32.totalorder %s22, 0
      %p61 = por %p59, %p60
      %s62 = ssub.s32 %s24, %s31
      %p63 = scmp.eq.s32.totalorder %s62, 0
      %s65 = sadd.s32 %s64, 1
      %s66 = scalar_select %p63, %s64, %s65
      %p69 = pneg %p63
      %p70 = scmp.eq.s32.totalorder %s16, 5
      %p71 = por %p69, %p70
      %p72 = scmp.ne.s32.totalorder %s64, %s67
      %p73 = scmp.eq.s32.totalorder %s16, 0
      %p74 = por %p72, %p73
      %p75 = scmp.ne.s32.totalorder %s64, %s67
      %p76 = scmp.eq.s32.totalorder %s21, 5
      %p77 = por %p75, %p76
      %p78 = scmp.ne.s32.totalorder %s67, %s68
      %p79 = scmp.eq.s32.totalorder %s21, 0
      %p80 = por %p78, %p79
      %p81 = scmp.ne.s32.totalorder %s67, %s68
      %p82 = scmp.eq.s32.totalorder %s22, 5
      %p83 = por %p81, %p82
      %p85 = scmp.ne.s32.totalorder %s68, %s84
      %p86 = scmp.eq.s32.totalorder %s22, 0
      %p87 = por %p85, %p86
      %s88 = ssub.s32 %s24, %s31
      %p89 = scmp.eq.s32.totalorder %s88, 0
      %s91 = sadd.s32 %s90, 1
      %s92 = scalar_select %p89, %s90, %s91
      %p95 = pneg %p89
      %p96 = scmp.eq.s32.totalorder %s16, 5
      %p97 = por %p95, %p96
      %p98 = scmp.ne.s32.totalorder %s90, %s93
      %p99 = scmp.eq.s32.totalorder %s16, 0
      %p100 = por %p98, %p99
      %p101 = scmp.ne.s32.totalorder %s90, %s93
      %p102 = scmp.eq.s32.totalorder %s21, 5
      %p103 = por %p101, %p102
      %p104 = scmp.ne.s32.totalorder %s93, %s94
      %p105 = scmp.eq.s32.totalorder %s21, 0
      %p106 = por %p104, %p105
      %p107 = scmp.ne.s32.totalorder %s93, %s94
      %p108 = scmp.eq.s32.totalorder %s22, 5
      %p109 = por %p107, %p108
      %p111 = scmp.ne.s32.totalorder %s94, %s110
      %p112 = scmp.eq.s32.totalorder %s22, 0
      %p113 = por %p111, %p112
      %s114 = ssub.s32 %s23, %s35
      %p115 = scmp.eq.s32.totalorder %s114, 0
      %s117 = sadd.s32 %s116, 1
      %s118 = scalar_select %p115, %s116, %s117
      %p121 = pneg %p115
      %p122 = scmp.eq.s32.totalorder %s16, 5
      %p123 = por %p121, %p122
      %p124 = scmp.ne.s32.totalorder %s116, %s119
      %p125 = scmp.eq.s32.totalorder %s16, 0
      %p126 = por %p124, %p125
      %p127 = scmp.ne.s32.totalorder %s116, %s119
      %p128 = scmp.eq.s32.totalorder %s21, 5
      %p129 = por %p127, %p128
      %p130 = scmp.ne.s32.totalorder %s119, %s120
      %p131 = scmp.eq.s32.totalorder %s21, 0
      %p132 = por %p130, %p131
      %p133 = scmp.ne.s32.totalorder %s119, %s120
      %p134 = scmp.eq.s32.totalorder %s22, 5
      %p135 = por %p133, %p134
      %p137 = scmp.ne.s32.totalorder %s120, %s136
      %p138 = scmp.eq.s32.totalorder %s22, 0
      %p139 = por %p137, %p138
      %s140 = ssub.s32 %s23, %s35
      %p141 = scmp.eq.s32.totalorder %s140, 0
      %s143 = sadd.s32 %s142, 1
      %s144 = scalar_select %p141, %s142, %s143
      %p147 = pneg %p141
      %p148 = scmp.eq.s32.totalorder %s16, 5
      %p149 = por %p147, %p148
      %p150 = scmp.ne.s32.totalorder %s142, %s145
      %p151 = scmp.eq.s32.totalorder %s16, 0
      %p152 = por %p150, %p151
      %p153 = scmp.ne.s32.totalorder %s142, %s145
      %p154 = scmp.eq.s32.totalorder %s21, 5
      %p155 = por %p153, %p154
      %p156 = scmp.ne.s32.totalorder %s145, %s146
      %p157 = scmp.eq.s32.totalorder %s21, 0
      %p158 = por %p156, %p157
      %p159 = scmp.ne.s32.totalorder %s145, %s146
      %p160 = scmp.eq.s32.totalorder %s22, 5
      %p161 = por %p159, %p160
      %p163 = scmp.ne.s32.totalorder %s146, %s162
      %p164 = scmp.eq.s32.totalorder %s22, 0
      %p165 = por %p163, %p164
      %p166 = scmp.le.s32.totalorder 1, %s16
      %p167 = scmp.lt.s32.totalorder %s16, 7
      %p168 = pnand %p166, %p167
      %p169 = pneg %p168
      // Predicated region
      $region9: #{tpu_custom_call.1} parent=5 // pred_check
        _
      $region10: #{tpu_custom_call.1} parent=5 // pred_check_branch
        %171 = sbr.rel (%p168) target = $region12
      $region11: #{tpu_custom_call.1} parent=5 // pred_region
        %s172 = ssub.s32 %s16, 1
      $region12: #{tpu_custom_call.1} parent=5 // pred_fallthru
        _
      %p173 = scmp.lt.s32.totalorder %s16, 6
      // Predicated region
      $region13: #{tpu_custom_call.1} parent=5 // pred_check
        %p174 = pneg %p173
      $region14: #{tpu_custom_call.1} parent=5 // pred_check_branch
        %176 = sbr.rel (%p174) target = $region16
      $region15: #{tpu_custom_call.1} parent=5 // pred_region
        // Predicated region
        $region17: #{tpu_custom_call.1} parent=15 // pred_check
          %p177 = pneg %p48
        $region18: #{tpu_custom_call.1} parent=15 // pred_check_branch
          %179 = sbr.rel (%p177) target = $region20
        $region19: #{tpu_custom_call.1} parent=15 // pred_region
          %p180 = scmp.lt.s32.totalorder %s23, 1
          %s181 = scalar_select %p180, %s23, 1
          %s182 = smul.addr %s181, 8
          %s183 = scalar_lea.vmem %s0, %s182
        $region20: #{tpu_custom_call.1} parent=15 // pred_fallthru
          _
        // Predicated region
        $region21: #{tpu_custom_call.1} parent=15 // pred_check
          %p184 = pneg %p74
        $region22: #{tpu_custom_call.1} parent=15 // pred_check_branch
          %186 = sbr.rel (%p184) target = $region24
        $region23: #{tpu_custom_call.1} parent=15 // pred_region
          %s187 = sand.u32 %s64, 1
          %s188 = scalar_lea.sflag [#allocation7], %s187
          %s189 = sand.u32 %s64, 1
          %s190 = smul.addr %s189, 64
          %s191 = scalar_lea.vmem [#allocation6], %s190
          %s192 = smul.u32 16, %s24
          %s194 = ssub.s32 1024, 1024
          %195 = vsyncadd %s188, %s194
          %s196 = smul.addr %s192, 64
          %s197 = scalar_lea.hbm %s1, %s196
          %s198 = sshll.u32 %s191, 4
          %s199 = int_to_ptr.vmem [resolvable:$true] %s198
          %204 = dma.hbm_to_vmem [thread:$0]  %s197, 1024, %s199, %s188, 64, 64, 4
        $region24: #{tpu_custom_call.1} parent=15 // pred_fallthru
          _
        // Predicated region
        $region25: #{tpu_custom_call.1} parent=15 // pred_check
          %p205 = pneg %p100
        $region26: #{tpu_custom_call.1} parent=15 // pred_check_branch
          %207 = sbr.rel (%p205) target = $region28
        $region27: #{tpu_custom_call.1} parent=15 // pred_region
          %s208 = sand.u32 %s90, 1
          %s209 = scalar_lea.sflag [#allocation9], %s208
          %s210 = sand.u32 %s90, 1
          %s211 = smul.addr %s210, 2
          %s212 = scalar_lea.vmem [#allocation8], %s211
          %s214 = ssub.s32 32, 32
          %215 = vsyncadd %s209, %s214
          %s216 = smul.addr %s24, 32
          %s217 = scalar_lea.hbm %s2, %s216
          %s219 = sshll.u32 %s212, 4
          %s220 = int_to_ptr.vmem [resolvable:$true] %s219
          %222 = dma.hbm_to_vmem [thread:$0]  %s217, 32, %s220, %s209
        $region28: #{tpu_custom_call.1} parent=15 // pred_fallthru
          _
        // Predicated region
        $region29: #{tpu_custom_call.1} parent=15 // pred_check
          %p223 = pneg %p126
        $region30: #{tpu_custom_call.1} parent=15 // pred_check_branch
          %225 = sbr.rel (%p223) target = $region32
        $region31: #{tpu_custom_call.1} parent=15 // pred_region
          %p226 = scmp.lt.s32.totalorder %s23, 1
          %s227 = scalar_select %p226, %s23, 1
          %s228 = smul.addr %s227, 8
          %s229 = scalar_lea.vmem %s3, %s228
        $region32: #{tpu_custom_call.1} parent=15 // pred_fallthru
          _
      $region16: #{tpu_custom_call.1} parent=5 // pred_fallthru
        _
      %p230 = scmp.le.s32.totalorder 1, %s16
      %p231 = scmp.lt.s32.totalorder %s16, 7
      %p232 = pnand %p230, %p231
      %p233 = pneg %p232
      // Predicated region
      $region33: #{tpu_custom_call.1} parent=5 // pred_check
        _
      $region34: #{tpu_custom_call.1} parent=5 // pred_check_branch
        %235 = sbr.rel (%p232) target = $region36
      $region35: #{tpu_custom_call.1} parent=5 // pred_region
        %s236 = ssub.s32 %s16, 1
        %s237 = sand.u32 %s67, 1
        %s238 = scalar_lea.sflag [#allocation7], %s237
        %s239 = sand.u32 %s67, 1
        %s240 = smul.addr %s239, 64
        %s241 = scalar_lea.vmem [#allocation6], %s240
        // Predicated region
        $region37: #{tpu_custom_call.1} parent=35 // pred_check
          %p242 = pneg %p80
        $region38: #{tpu_custom_call.1} parent=35 // pred_check_branch
          %244 = sbr.rel (%p242) target = $region40
        $region39: #{tpu_custom_call.1} parent=35 // pred_region
          %245 = dma.done %s238, 1024
        $region40: #{tpu_custom_call.1} parent=35 // pred_fallthru
          _
        %s246 = sand.u32 %s93, 1
        %s247 = scalar_lea.sflag [#allocation9], %s246
        %s248 = sand.u32 %s93, 1
        %s249 = smul.addr %s248, 2
        %s250 = scalar_lea.vmem [#allocation8], %s249
        // Predicated region
        $region41: #{tpu_custom_call.1} parent=35 // pred_check
          %p251 = pneg %p106
        $region42: #{tpu_custom_call.1} parent=35 // pred_check_branch
          %253 = sbr.rel (%p251) target = $region44
        $region43: #{tpu_custom_call.1} parent=35 // pred_region
          %254 = dma.done %s247, 32
        $region44: #{tpu_custom_call.1} parent=35 // pred_fallthru
          _
        %p255 = scmp.lt.s32.totalorder %s25, 1
        %s256 = scalar_select %p255, %s25, 1
        %s257 = smul.addr %s256, 8
        %s258 = scalar_lea.vmem %s0, %s257
        %p259 = pneg %p54
        %p260 = pneg %p51
        %s261 = sand.u32 %s67, 1
        %s262 = scalar_lea.sflag [#allocation7], %s261
        %s263 = sand.u32 %s67, 1
        %s264 = smul.addr %s263, 64
        %s265 = scalar_lea.vmem [#allocation6], %s264
        %p266 = pneg %p80
        %p267 = pneg %p77
        %s268 = sand.u32 %s93, 1
        %s269 = scalar_lea.sflag [#allocation9], %s268
        %s270 = sand.u32 %s93, 1
        %s271 = smul.addr %s270, 2
        %s272 = scalar_lea.vmem [#allocation8], %s271
        %p273 = pneg %p106
        %p274 = pneg %p103
        %p275 = scmp.lt.s32.totalorder %s25, 1
        %s276 = scalar_select %p275, %s25, 1
        %s277 = smul.addr %s276, 8
        %s278 = scalar_lea.vmem %s3, %s277
        %p279 = pneg %p132
        %p280 = pneg %p129
        %p281 = pneg %p158
        %p282 = pneg %p155
        %p283 = scmp.lt.s32.totalorder %s25, 1
        %s284 = scalar_select %p283, %s25, 1
        %s285 = smul.addr %s284, 8
        %s286 = scalar_lea.vmem %s4, %s285
        %p287 = scmp.lt.s32.totalorder %s25, 1
        %s288 = scalar_select %p287, %s25, 1
        %s289 = smul.addr %s288, 8
        %s290 = scalar_lea.vmem %s0, %s289
        %s291 = smul.u32 16, %s26
        %p292 = scmp.lt.s32.totalorder %s25, 1
        %s293 = scalar_select %p292, %s25, 1
        %s294 = smul.addr %s293, 8
        %s295 = scalar_lea.vmem %s3, %s294
        %p296 = scmp.lt.s32.totalorder %s25, 1
        %s297 = scalar_select %p296, %s25, 1
        %s298 = smul.addr %s297, 8
        %s299 = scalar_lea.vmem %s4, %s298
        %p301 = scmp.eq.s32.totalorder %s26, 0
        // Predicated region
        $region45: #{tpu_custom_call.1} parent=35 // pred_check
          %p302 = pneg %p301
        $region46: #{tpu_custom_call.1} parent=35 // pred_check_branch
          %304 = sbr.rel (%p302) target = $region48
        $region47: #{tpu_custom_call.1} parent=35 // pred_region
          %v305 = vld [vmem:[%s290] sm:$0xff]
          %v306 = vmul.f32 %v305, %v305
          %307 = vadd.xlane.f32.xlu0 %v306
          %v308 = vpop.xlane.xlu0 %307
          %v309 = vmax.f32 %v308, 1e-24
          %v310 = vrsqrt.pop %v309
          %v311 = vmul.f32 %v305, %v310
          %v312 = vpack.c.bf16 %v311, %v311
          %313 = vst [vmem:[#allocation2] sm:$0xf] %v312
          %vm314 = vcmask 7168
          %315 = vst.msk [vmem:[#allocation3] sm:$0xff] %vm314, -1e+30
          %316 = vst.msk [vmem:[#allocation4] sm:$0xff] %vm314, 0.0
          %317 = vst.msk [vmem:[#allocation5] sm:$0xff] %vm314, 0.0
        $region48: #{tpu_custom_call.1} parent=35 // pred_fallthru
          _
        %v318 = vld [vmem:[#allocation2] sm:$0xf]
        %v319 = vld [vmem:[%s241] sm:$0xf]
        %v320 = vld [vmem:[%s241 + $0x4] sm:$0xf]
        %v321 = vld [vmem:[%s241 + $0x8] sm:$0xf]
        %v322 = vld [vmem:[%s241 + $0xc] sm:$0xf]
        %v323 = vld [vmem:[%s241 + $0x10] sm:$0xf]
        %v324 = vld [vmem:[%s241 + $0x14] sm:$0xf]
        %v325 = vld [vmem:[%s241 + $0x18] sm:$0xf]
        %v326 = vld [vmem:[%s241 + $0x1c] sm:$0xf]
        %v327 = vld [vmem:[%s241 + $0x20] sm:$0xf]
        %v328 = vld [vmem:[%s241 + $0x24] sm:$0xf]
        %v329 = vld [vmem:[%s241 + $0x28] sm:$0xf]
        %v330 = vld [vmem:[%s241 + $0x2c] sm:$0xf]
        %v331 = vld [vmem:[%s241 + $0x30] sm:$0xf]
        %v332 = vld [vmem:[%s241 + $0x34] sm:$0xf]
        %v333 = vld [vmem:[%s241 + $0x38] sm:$0xf]
        %v334 = vld [vmem:[%s241 + $0x3c] sm:$0xf]
        %v351 = vunpack.c.l.b16 %v319
        %v352 = vunpack.c.l.b16 %v320
        %v353 = vunpack.c.l.b16 %v321
        %v354 = vunpack.c.l.b16 %v322
        %v355 = vunpack.c.l.b16 %v323
        %v356 = vunpack.c.l.b16 %v324
        %v357 = vunpack.c.l.b16 %v325
        %v358 = vunpack.c.l.b16 %v326
        %v359 = vunpack.c.l.b16 %v327
        %v360 = vunpack.c.l.b16 %v328
        %v361 = vunpack.c.l.b16 %v329
        %v362 = vunpack.c.l.b16 %v330
        %v363 = vunpack.c.l.b16 %v331
        %v364 = vunpack.c.l.b16 %v332
        %v365 = vunpack.c.l.b16 %v333
        %v366 = vunpack.c.l.b16 %v334
        %v367 = vpack.c.b16 %v352, %v351
        %v368 = vpack.c.b16 %v354, %v353
        %v369 = vpack.c.b16 %v356, %v355
        %v370 = vpack.c.b16 %v358, %v357
        %v371 = vpack.c.b16 %v360, %v359
        %v372 = vpack.c.b16 %v362, %v361
        %v373 = vpack.c.b16 %v364, %v363
        %v374 = vpack.c.b16 %v366, %v365
        %383 = vmatprep.subr.bf16.mxu0 0
        %384 = vmatpush1.bf16.xpose.msra.mxu0 %v374
        %385 = vmatprep.subr.bf16.mxu0 0
        %386 = vmatpush1.bf16.xpose.msra.mxu0 %v373
        %387 = vmatprep.subr.bf16.mxu0 0
        %388 = vmatpush1.bf16.xpose.msra.mxu0 %v372
        %389 = vmatprep.subr.bf16.mxu0 0
        %390 = vmatpush1.bf16.xpose.msra.mxu0 %v371
        %391 = vmatprep.subr.bf16.mxu0 0
        %392 = vmatpush1.bf16.xpose.msra.mxu0 %v370
        %393 = vmatprep.subr.bf16.mxu0 0
        %394 = vmatpush1.bf16.xpose.msra.mxu0 %v369
        %395 = vmatprep.subr.bf16.mxu0 0
        %396 = vmatpush1.bf16.xpose.msra.mxu0 %v368
        %397 = vmatprep.subr.bf16.mxu0 0
        %398 = vmatpush1.bf16.xpose.msra.mxu0 %v367
        %399 = vmatprep.subr.bf16.mxu0 0
        %400 = vmatpush2.bf16.xpose.msra.mxu0 0
        %401 = vmatprep.subr.bf16.mxu0 0
        %402 = vmatpush2.bf16.xpose.msra.mxu0 0
        %403 = vmatprep.subr.bf16.mxu0 0
        %404 = vmatpush2.bf16.xpose.msra.mxu0 0
        %405 = vmatprep.subr.bf16.mxu0 0
        %406 = vmatpush2.bf16.xpose.msra.mxu0 0
        %407 = vmatprep.subr.bf16.mxu0 0
        %408 = vmatpush2.bf16.xpose.msra.mxu0 0
        %409 = vmatprep.subr.bf16.mxu0 0
        %410 = vmatpush2.bf16.xpose.msra.mxu0 0
        %411 = vmatprep.subr.bf16.mxu0 0
        %412 = vmatpush2.bf16.xpose.msra.mxu0 0
        %413 = vmatprep.subr.bf16.mxu0 0
        %414 = vmatpush2.bf16.xpose.msra.mxu0 0
        %415 = vmatprep.mubr.bf16.mxu0 0
        %416 = vmatmul.mubr.bf16.gmra.mxu0 %v318
        %v417 = vpop.f32.mrf.mxu0
        %v418 = vadd.f32 0.0, %v417
        %v419 = vpop.f32.mrf.mxu0
        %v420 = vpop.f32.mrf.mxu0
        %v421 = vpop.f32.mrf.mxu0
        %422 = vdwg.mxu0
        %v423 = vld [vmem:[%s250] sm:$0x1]
        %v424 = vld [vmem:[%s250 + $0x1] sm:$0x1]
        %v425 = vlaneseq
        %v426 = vshrl.u32 %v425, 7
        %v427 = vsub.s32 0, %v426
        %v428 = vrot.slane %v423, %v427
        %v429 = vmul.f32 %v418, %v428
        %v430 = vmax.f32 %v429, -0.9999999
        %v431 = vmin.f32 %v430, 0.9999999
        %v432 = vld [vmem:[%s295] sm:$0xff]
        %s433 = smul.u32 %s26, 128
        %v434 = vstv %s433
        %v435 = vsub.s32 %v432, %v434
        %v436 = vlaneseq
        %v437 = vand.u32 %v436, 127
        %438 = vset.pattern.permute.xlu0 0
        %439 = vperm.xlu0 %438, %v435
        %v440 = vpop.permute.xlu0 %439
        %vm441 = vcmp.eq.s32.totalorder %v437, %v440
        %v442 = vmul.f32 %v431, 85.312
        %v443 = vsub.f32 %v442, 46.912
        %v444 = vmul.f32 %v431, 64.0
        %v445 = vsel %vm441, %v443, %v444
        %v446 = vlaneseq
        %v447 = vshrl.u32 %v446, 7
        %v448 = vsub.s32 0, %v447
        %v449 = vrot.slane %v424, %v448
        %v450 = vadd.f32 %v445, %v449
        %v451 = vld [vmem:[#allocation3] sm:$0xff]
        %452 = vmax.xlane.f32.xlu0 %v450
        %v453 = vpop.xlane.xlu0 %452
        %v454 = vmax.f32 %v451, %v453
        %v455 = vsub.f32 %v451, %v454
        %v456 = vmul.f32 %v455, 1.442695
        %v457 = vpow.pop %v456
        %459 = vset.pattern.permute.xlu0 0
        %460 = vperm.xlu0 %459, %v454
        %v461 = vpop.permute.xlu0 %460
        %v463 = vsub.f32 %v450, %v461
        %v464 = vmul.f32 %v463, 1.442695
        %v465 = vpow.pop %v464
        %v466 = vld [vmem:[#allocation4] sm:$0xff]
        %v467 = vmul.f32 %v457, %v466
        %468 = vadd.xlane.f32.xlu0 %v465
        %v469 = vpop.xlane.xlu0 %468
        %v470 = vadd.f32 %v467, %v469
        %vm471 = vcmask 7168
        %472 = vst.msk [vmem:[#allocation4] sm:$0xff] %vm471, %v470
        %v473 = vld [vmem:[#allocation5] sm:$0xff]
        %v474 = vsel %vm441, %v450, 0.0
        %475 = vadd.xlane.f32.xlu0 %v474
        %v476 = vpop.xlane.xlu0 %475
        %v477 = vadd.f32 %v473, %v476
        %478 = vst.msk [vmem:[#allocation5] sm:$0xff] %vm471, %v477
        %479 = vst.msk [vmem:[#allocation3] sm:$0xff] %vm471, %v454
        %p480 = scmp.eq.s32.totalorder %s26, 2
        // Predicated region
        $region49: #{tpu_custom_call.1} parent=35 // pred_check
          %p481 = pneg %p480
        $region50: #{tpu_custom_call.1} parent=35 // pred_check_branch
          %483 = sbr.rel (%p481) target = $region52
        $region51: #{tpu_custom_call.1} parent=35 // pred_region
          %v484 = vld [vmem:[#allocation3] sm:$0xff]
          %v485 = vld [vmem:[#allocation4] sm:$0xff]
          %v486 = vlog2.pop %v485
          %v487 = vmul.f32 %v486, 0.6931472
          %v488 = vadd.f32 %v484, %v487
          %v489 = vld [vmem:[#allocation5] sm:$0xff]
          %v490 = vsub.f32 %v488, %v489
          %s491 = smul.u32 %s25, 8
          %v492 = vlaneseq
          %v493 = vshrl.u32 %v492, 7
          %v494 = vstv %s491
          %v495 = vadd.s32 %v494, %v493
          %vm496 = vcmp.lt.s32.totalorder %v495, 13
          %v497 = vsel %vm496, %v490, 0.0
          %498 = vst.msk [vmem:[%s299] sm:$0xff] %vm471, %v497
        $region52: #{tpu_custom_call.1} parent=35 // pred_fallthru
          _
        %p499 = scmp.lt.s32.totalorder %s25, 1
        %s500 = scalar_select %p499, %s25, 1
        %s501 = smul.addr %s500, 8
        %s502 = scalar_lea.vmem %s4, %s501
        // Predicated region
        $region53: #{tpu_custom_call.1} parent=35 // pred_check
          %p503 = pneg %p155
        $region54: #{tpu_custom_call.1} parent=35 // pred_check_branch
          %505 = sbr.rel (%p503) target = $region56
        $region55: #{tpu_custom_call.1} parent=35 // pred_region
          _
        $region56: #{tpu_custom_call.1} parent=35 // pred_fallthru
          _
      $region36: #{tpu_custom_call.1} parent=5 // pred_fallthru
        _
      %p506 = scmp.le.s32.totalorder 2, %s16
      // Predicated region
      $region57: #{tpu_custom_call.1} parent=5 // pred_check
        %p507 = pneg %p506
      $region58: #{tpu_custom_call.1} parent=5 // pred_check_branch
        %509 = sbr.rel (%p507) target = $region60
      $region59: #{tpu_custom_call.1} parent=5 // pred_region
        %s510 = ssub.s32 %s16, 2
        // Predicated region
        $region61: #{tpu_custom_call.1} parent=59 // pred_check
          %p511 = pneg %p161
        $region62: #{tpu_custom_call.1} parent=59 // pred_check_branch
          %513 = sbr.rel (%p511) target = $region64
        $region63: #{tpu_custom_call.1} parent=59 // pred_region
          %p514 = scmp.lt.s32.totalorder %s27, 1
          %s515 = scalar_select %p514, %s27, 1
          %s516 = smul.addr %s515, 8
          %s517 = scalar_lea.vmem %s4, %s516
        $region64: #{tpu_custom_call.1} parent=59 // pred_fallthru
          _
      $region60: #{tpu_custom_call.1} parent=5 // pred_fallthru
        _
    $region6: #{tpu_custom_call.1} parent=1 // loop_footer
      %s20 = sadd.s32 1, %s16
    $region7: #{tpu_custom_call.1} parent=1 // loop_footer_branch
      %15 = sbr.rel target = $region3
    $region8: #{tpu_custom_call.1} parent=1 // loop_exit
      _
    %518 = vsyncpa [#allocation7], 1
    %s519 = scalar_lea.sflag [#allocation7], 1
    %520 = vsyncpa %s519, 1
    %521 = vsyncpa [#allocation9], 1
    %s522 = scalar_lea.sflag [#allocation9], 1
    %523 = vsyncpa %s522, 1

</llo_original>
